<compile_context>
chip_gen: v5e
topology: v5e:2x2
jax: 0.10.0
libtpu: 0.0.40
codegen_flags: <defaults>
</compile_context>

<pallas_src>
import functools

import jax
import jax.numpy as jnp
from jax.experimental import pallas as pl
from jax.experimental.pallas import tpu as pltpu


def _round_up(x, m):
    return ((x + m - 1) // m) * m


def _relu_layer_kernel(x_ref, wt_ref, b_ref, o_ref):
    # x_ref : (tm, K) bf16   wt_ref : (K, tn) bf16
    # b_ref : (1, tn)  f32   o_ref  : (tm, tn) f32
    y = jnp.dot(x_ref[...], wt_ref[...], preferred_element_type=jnp.float32)
    y = y + b_ref[...]                     # broadcast (1, tn) over rows, in f32
    y = jnp.where(y > 0, y, 0.1 * y)       # leaky_relu, negative_slope = 0.1
    o_ref[...] = y.astype(o_ref.dtype)


@functools.partial(jax.jit, static_argnames=("tm", "tn"))
def relu_layer_custom(x, wt, b, *, tm=256, tn=512):
    """leaky_relu(x @ wt + b, 0.1) as a fused Pallas TPU kernel.

    x  : (B, in_features)               float32
    wt : (in_features, out_features)    float32  (weight stored pre-transposed)
    b  : (out_features,)                float32
    """
    B, K = x.shape
    K2, N = wt.shape
    assert K == K2 and b.shape == (N,)

    # Effective tile sizes: shrink for small problems but keep (8,128) alignment.
    tm = min(tm, _round_up(B, 8))
    tn = min(tn, _round_up(N, 128))
    B_pad = _round_up(B, tm)
    N_pad = _round_up(N, tn)

    # Pad to tile multiples; bf16 MXU inputs (accumulation stays f32).
    x_p = jnp.zeros((B_pad, K), jnp.bfloat16).at[:B, :].set(x.astype(jnp.bfloat16))
    wt_p = jnp.zeros((K, N_pad), jnp.bfloat16).at[:, :N].set(wt.astype(jnp.bfloat16))
    b_p = jnp.zeros((1, N_pad), jnp.float32).at[0, :N].set(b.astype(jnp.float32))

    grid = (B_pad // tm, N_pad // tn)
    out = pl.pallas_call(
        _relu_layer_kernel,
        out_shape=jax.ShapeDtypeStruct((B_pad, N_pad), x.dtype),
        grid_spec=pltpu.PrefetchScalarGridSpec(
            num_scalar_prefetch=0,
            grid=grid,
            in_specs=[
                pl.BlockSpec((tm, K), lambda i, j: (i, 0)),   # x row tile
                pl.BlockSpec((K, tn), lambda i, j: (0, j)),   # W^T column tile
                pl.BlockSpec((1, tn), lambda i, j: (0, j)),   # bias tile
            ],
            out_specs=pl.BlockSpec((tm, tn), lambda i, j: (i, j)),
        ),
        compiler_params=pltpu.CompilerParams(
            dimension_semantics=("parallel", "parallel"),
            vmem_limit_bytes=64 * 1024 * 1024,
        ),
    )(x_p, wt_p, b_p)
    return out[:B, :N]


def init_params(key, in_features, out_features, omega_0=30):
    """Parameters matching ReLULayer_custom.__init__, stored kernel-ready.

    Returns (wt, b) with the weight already transposed to
    (in_features, out_features) so the forward wrapper never transposes.

    weight ~ U(-1/(omega_0*in_features), 1/(omega_0*in_features))  (omega_0 > 1)
    bias   ~ U(-1/sqrt(in_features),     1/sqrt(in_features))      (nn.Linear default)
    """
    kw, kb = jax.random.split(key)
    w_bound = 1.0 / (omega_0 * in_features)
    b_bound = 1.0 / (in_features ** 0.5)
    wt = jax.random.uniform(kw, (in_features, out_features),
                            minval=-w_bound, maxval=w_bound, dtype=jnp.float32)
    b = jax.random.uniform(kb, (out_features,),
                           minval=-b_bound, maxval=b_bound, dtype=jnp.float32)
    return wt, b


def _reference(x, wt, b):
    y = x @ wt + b
    return jnp.where(y > 0, y, 0.1 * y)


if __name__ == "__main__":
    key = jax.random.PRNGKey(0)
    k_x, k_p, k_x2, k_p2 = jax.random.split(key, 4)

    # Small case (matches the module's typical hidden sizes, exercises N<128 pad).
    B, IN, OUT = 8, 32, 32
    x = jax.random.normal(k_x, (B, IN), dtype=jnp.float32)
    wt, b = init_params(k_p, IN, OUT, omega_0=30)
    out = jax.block_until_ready(relu_layer_custom(x, wt, b))
    ref = _reference(x, wt, b)
    assert out.shape == (B, OUT)
    assert jnp.allclose(out, ref, atol=1e-2, rtol=1e-2), \
        float(jnp.max(jnp.abs(out - ref)))

    # Ragged case: exercises B-padding (B % tm != 0) and multi-tile grid.
    B2, IN2, OUT2 = 300, 64, 200
    x2 = jax.random.normal(k_x2, (B2, IN2), dtype=jnp.float32)
    wt2, b2 = init_params(k_p2, IN2, OUT2, omega_0=30)
    out2 = jax.block_until_ready(relu_layer_custom(x2, wt2, b2))
    ref2 = _reference(x2, wt2, b2)
    assert out2.shape == (B2, OUT2)
    assert jnp.allclose(out2, ref2, atol=1e-2, rtol=1e-2), \
        float(jnp.max(jnp.abs(out2 - ref2)))

    print("KERNEL_OK")
</pallas_src>

<mosaic_0001>
module attributes {stable_mosaic.version = 11 : i64} {
  func.func @_relu_layer_kernel(%arg0: i32, %arg1: i32, %arg2: memref<8x32xbf16, #tpu.memory_space<vmem>>, %arg3: memref<32x128xbf16, #tpu.memory_space<vmem>>, %arg4: memref<1x128xf32, #tpu.memory_space<vmem>>, %arg5: memref<8x128xf32, #tpu.memory_space<vmem>>) attributes {dimension_semantics = [#tpu.dimension_semantics<parallel>, #tpu.dimension_semantics<parallel>], iteration_bounds = array<i64: 1, 1>, scalar_prefetch = 0 : i64, scratch_operands = 0 : i64, tpu.core_type = #tpu.core_type<tc>, window_params = [{transform_indices = @transform_0, window_bounds = array<i64: 8, 32>}, {transform_indices = @transform_1, window_bounds = array<i64: 32, 128>}, {transform_indices = @transform_2, window_bounds = array<i64: 1, 128>}, {transform_indices = @transform_3, window_bounds = array<i64: 8, 128>}]} {
    %c0 = arith.constant 0 : index
    %c0_0 = arith.constant 0 : index
    %0 = vector.load %arg2[%c0, %c0_0] : memref<8x32xbf16, #tpu.memory_space<vmem>>, vector<8x32xbf16>
    %c0_1 = arith.constant 0 : index
    %c0_2 = arith.constant 0 : index
    %1 = vector.load %arg3[%c0_1, %c0_2] : memref<32x128xbf16, #tpu.memory_space<vmem>>, vector<32x128xbf16>
    %cst = arith.constant dense<0.000000e+00> : vector<8x128xf32>
    %2 = tpu.matmul %0, %1, %cst {dimension_numbers = #tpu.dot_dimension_numbers<[1], [0], [0], [1], [0, 0, 1, 1], [], []>} : vector<8x32xbf16>, vector<32x128xbf16>, vector<8x128xf32> -> vector<8x128xf32>
    %c0_3 = arith.constant 0 : index
    %c0_4 = arith.constant 0 : index
    %3 = vector.load %arg4[%c0_3, %c0_4] : memref<1x128xf32, #tpu.memory_space<vmem>>, vector<1x128xf32>
    %4 = vector.broadcast %3 : vector<1x128xf32> to vector<8x128xf32>
    %5 = arith.addf %2, %4 : vector<8x128xf32>
    %cst_5 = arith.constant 0.000000e+00 : f32
    %6 = vector.broadcast %cst_5 : f32 to vector<8x128xf32>
    %7 = arith.cmpf ogt, %5, %6 : vector<8x128xf32>
    %cst_6 = arith.constant 1.000000e-01 : f32
    %8 = vector.broadcast %cst_6 : f32 to vector<8x128xf32>
    %9 = arith.mulf %8, %5 : vector<8x128xf32>
    %10 = arith.select %7, %5, %9 : vector<8x128xi1>, vector<8x128xf32>
    %c0_7 = arith.constant 0 : index
    %c0_8 = arith.constant 0 : index
    %11 = vector.load %arg5[%c0_7, %c0_8] : memref<8x128xf32, #tpu.memory_space<vmem>>, vector<8x128xf32>
    tpu.vector_store %arg5[%c0_7, %c0_8], %10 {strides = array<i32>} : memref<8x128xf32, #tpu.memory_space<vmem>>, vector<8x128xf32>,
    return
  }
  func.func @transform_0(%arg0: i32, %arg1: i32) -> (i32, i32) {
    %c0_i32 = arith.constant 0 : i32
    %c0_i32_0 = arith.constant 0 : i32
    return %arg0, %c0_i32 : i32, i32
  }
  func.func @transform_1(%arg0: i32, %arg1: i32) -> (i32, i32) {
    %c0_i32 = arith.constant 0 : i32
    %c0_i32_0 = arith.constant 0 : i32
    return %c0_i32, %arg1 : i32, i32
  }
  func.func @transform_2(%arg0: i32, %arg1: i32) -> (i32, i32) {
    %c0_i32 = arith.constant 0 : i32
    %c0_i32_0 = arith.constant 0 : i32
    return %c0_i32, %arg1 : i32, i32
  }
  func.func @transform_3(%arg0: i32, %arg1: i32) -> (i32, i32) {
    %c0_i32 = arith.constant 0 : i32
    return %arg0, %arg1 : i32, i32
  }
}

</mosaic_0001>

<llo_original>
// kernel: relu_layer_custom.1
$region0: #{relu_layer_custom.1}
  #allocation0 [shape = 'u32[]', space=smem, size = 0x4, offset = 0x4, fixed_abs, tag = 'smem constant byte address 0x4 - core index']
  #allocation1 [shape = 'u32[72,128]{1,0:T(1,128)}', space=vmem, size = 0x9000, scoped, tag = 'internal scratch']
  %s0 = inlined_call_operand.vmem [shape: bf16[8,32], index: 0, kind: input, shape index: {}]
  %s1 = inlined_call_operand.vmem [shape: bf16[32,128], index: 1, kind: input, shape index: {}]
  %s2 = inlined_call_operand.vmem [shape: f32[1,128], index: 2, kind: input, shape index: {}]
  %s3 = inlined_call_operand.hbm [shape: f32[8,128], index: 3, kind: output, shape index: {}]
  %s4 = sld [smem:[#allocation0]]
  $region22: #{relu_layer_custom.1} parent=0
    _
  %s6 = ssub.s32 1, %s4
  %s7 = scalar_select 0, %s6, %s4
  $region1: #{relu_layer_custom.1} parent=0
    #allocation2 [shape = 'u8[4096]{0}', space=vmem, size = 0x1000, scoped, tag = 'output window, operand 0, single buffered']
    #allocation3 [shape = 's32[1]{0}', space=sflag, size = 0x4, scoped, tag = 'scoped memory for relu_layer_custom.1']
    %8 = vsyncpa [#allocation3], 0
    // Predicated region
    $region2: #{relu_layer_custom.1} parent=1 // pred_check
      _
    $region3: #{relu_layer_custom.1} parent=1 // pred_check_branch
      %10 = sbr.rel (0) target = $region5
    $region4: #{relu_layer_custom.1} parent=1 // pred_region
      _
    $region5: #{relu_layer_custom.1} parent=1 // pred_fallthru
      _
    // Predicated region
    $region6: #{relu_layer_custom.1} parent=1 // pred_check
      _
    $region7: #{relu_layer_custom.1} parent=1 // pred_check_branch
      %12 = sbr.rel (0) target = $region9
    $region8: #{relu_layer_custom.1} parent=1 // pred_region
      _
    $region9: #{relu_layer_custom.1} parent=1 // pred_fallthru
      _
    // Predicated region
    $region10: #{relu_layer_custom.1} parent=1 // pred_check
      _
    $region11: #{relu_layer_custom.1} parent=1 // pred_check_branch
      %14 = sbr.rel (0) target = $region13
    $region12: #{relu_layer_custom.1} parent=1 // pred_region
      _
    $region13: #{relu_layer_custom.1} parent=1 // pred_fallthru
      _
    %v16 = vld [vmem:[%s0] sm:$0xf]
    %v17 = vld [vmem:[%s1] sm:$0xf]
    %v18 = vld [vmem:[%s1 + $0x4] sm:$0xf]
    %v19 = vld [vmem:[%s1 + $0x8] sm:$0xf]
    %v20 = vld [vmem:[%s1 + $0xc] sm:$0xf]
    %v21 = vld [vmem:[%s2] sm:$0x1]
    %v23 = vperm.slane %v21, 0
    %v29 = vunpack.c.l.b16 %v17
    %v30 = vunpack.c.l.b16 %v18
    %v31 = vunpack.c.l.b16 %v19
    %v32 = vunpack.c.l.b16 %v20
    %v33 = vpack.c.b16 %v30, %v29
    %v34 = vpack.c.b16 %v32, %v31
    %vm37 = vcmask 261120
    %v39 = vsel %vm37, %v16, 0
    %41 = vmatpush.bf16.msra.mxu0 0
    %42 = vmatpush.bf16.msra.mxu0 0
    %43 = vmatpush.bf16.msra.mxu0 0
    %44 = vmatpush.bf16.msra.mxu0 0
    %45 = vmatpush.bf16.msra.mxu0 0
    %46 = vmatpush.bf16.msra.mxu0 0
    %47 = vmatpush.bf16.msra.mxu0 %v34
    %48 = vmatpush.bf16.msra.mxu0 %v33
    %49 = vmatmul.bf16.gmra.mxu0 %v39
    %v50 = vpop.f32.mrf.mxu0
    %v51 = vadd.f32 %v23, %v50
    %v52 = vpop.f32.mrf.mxu0
    %53 = vdwg.mxu0
    %vm54 = vcmp.gt.f32.partialorder %v51, 0.0
    %v55 = vmul.f32 %v51, 0.1
    %v56 = vsel %vm54, %v51, %v55
    %57 = vst [vmem:[#allocation2] sm:$0xff] %v56
    // Predicated region
    $region14: #{relu_layer_custom.1} parent=1 // pred_check
      _
    $region15: #{relu_layer_custom.1} parent=1 // pred_check_branch
      %59 = sbr.rel (0) target = $region17
    $region16: #{relu_layer_custom.1} parent=1 // pred_region
      %61 = vsyncadd [#allocation3], 0
      %s63 = sshll.u32 [#allocation2], 4
      %s64 = int_to_ptr.vmem [resolvable:$true] %s63
      %s65 = sshll.u32 %s3, 4
      %s66 = int_to_ptr.hbm [resolvable:$true] %s65
      %68 = dma.vmem_to_hbm [thread:$0]  %s64, 128, %s66, [#allocation3]
    $region17: #{relu_layer_custom.1} parent=1 // pred_fallthru
      _
    // Predicated region
    $region18: #{relu_layer_custom.1} parent=1 // pred_check
      _
    $region19: #{relu_layer_custom.1} parent=1 // pred_check_branch
      %70 = sbr.rel (0) target = $region21
    $region20: #{relu_layer_custom.1} parent=1 // pred_region
      %72 = dma.done [#allocation3], 128
    $region21: #{relu_layer_custom.1} parent=1 // pred_fallthru
      _
    %73 = vsyncpa [#allocation3], 1

</llo_original>
